<compile_context>
chip_gen: v7x
topology: tpu7x:2x2x1
jax: 0.10.0
libtpu: 0.0.40
codegen_flags: <defaults>
</compile_context>

<pallas_src>
import functools

import numpy as np
import jax
import jax.numpy as jnp
from jax import lax
from jax.experimental import pallas as pl
from jax.experimental.pallas import tpu as pltpu


def _spectral_block_kernel(x_ref, w1_ref, w2_ref, sb_ref, m1_ref, m2_ref, o_ref, *,
                           S, Bc, shifts):
    # x_ref : (Bc, Cin_p,  S)        input images, flat spatial on lanes
    # w1_ref: (Cout_p, 9*Cin_p)      conv1 weights, column = (kh*3+kw)*Cin_p + cin
    # w2_ref: (Cout_p, 9*Cout_p)     conv2 weights, same column layout
    # sb_ref: (Cout_p, 5)            [scale1, bias1, scale2, bias2, rope] (BN folded)
    # m1_ref: (9*Cin_p,  Bc*S)       {0,1} boundary masks in im2col row layout
    # m2_ref: (9*Cout_p, Bc*S)
    # o_ref : (Bc, Cout_p, S)        output (lane-dense: last dim S)

    # Fuse the batch chunk onto the lane axis: (Cin_p, Bc*S).  S is a multiple of
    # 128, so this is an aligned lane concat (and a no-op for Bc == 1).
    if Bc == 1:
        x = x_ref[0]
    else:
        x = jnp.concatenate([x_ref[b] for b in range(Bc)], axis=-1)

    s1, b1 = sb_ref[:, 0:1], sb_ref[:, 1:2]
    s2, b2 = sb_ref[:, 2:3], sb_ref[:, 3:4]
    rope = sb_ref[:, 4:5]

    def im2col(v, mask):
        # 9 in-register circular shifts (XLU) + one aligned sublane concat + one vmul.
        cols = jnp.concatenate(
            [v if s == 0 else pltpu.roll(v, s, axis=1) for s in shifts], axis=0)
        return cols * mask

    # conv1 + folded BN1 + ReLU: one (Cout_p, 9*Cin_p) @ (9*Cin_p, N) MXU matmul.
    h1 = jnp.dot(w1_ref[...], im2col(x, m1_ref[...]),
                 preferred_element_type=jnp.float32)
    h1 = jnp.maximum(h1 * s1 + b1, 0.0)

    # conv2 + folded BN2 + ReLU + rope scaling.
    h2 = jnp.dot(w2_ref[...], im2col(h1, m2_ref[...]),
                 preferred_element_type=jnp.float32)
    h2 = jnp.maximum(h2 * s2 + b2, 0.0) * rope

    # Lane-dense stores (last dim = S); aligned lane slices for the fused batch.
    if Bc == 1:
        o_ref[0] = h2.astype(o_ref.dtype)
    else:
        for b in range(Bc):
            o_ref[b] = h2[:, b * S:(b + 1) * S].astype(o_ref.dtype)


@functools.lru_cache(maxsize=None)
def _roll_matches_jnp():
    """One-time cached probe: True iff pltpu.roll uses jnp.roll's shift convention.

    pltpu.roll matches jnp.roll on current Mosaic; the probe keeps the conv tap
    shifts correct even if the rotation convention ever differs.
    """
    def k(x_ref, o_ref):
        o_ref[...] = pltpu.roll(x_ref[...], 1, axis=1)

    x = jnp.broadcast_to(jnp.arange(256, dtype=jnp.float32), (8, 256))
    y = pl.pallas_call(k, out_shape=jax.ShapeDtypeStruct((8, 256), jnp.float32))(x)
    return float(y[0, 1]) == 0.0


def _boundary_masks(H, W):
    """(9, H*W) float32 {0,1} masks: tap (kh,kw) reads an in-bounds source pixel."""
    idx = np.arange(H * W, dtype=np.int64)
    h, w = idx // W, idx % W
    rows = []
    for kh in range(3):
        for kw in range(3):
            hh, ww = h + kh - 1, w + kw - 1
            rows.append((hh >= 0) & (hh < H) & (ww >= 0) & (ww < W))
    return np.stack(rows, axis=0).astype(np.float32)


def spectral_coordinate_block(x_nchw, params, eps=1e-5, images_per_step=None):
    """Pallas forward. x_nchw: (B, Cin, H, W) float32 -> (B, Cout, H, W) float32."""
    B, Cin, H, W = x_nchw.shape
    Cout = params["w1"].shape[0]
    S = H * W

    if images_per_step is None:
        # Keep >=2 'parallel' grid steps when the batch allows it so both v7x
        # TensorCores get work; on single-TC v5e/v6e pass images_per_step=B to fuse
        # the whole batch onto lanes in a single grid step.
        images_per_step = B // 2 if (B % 2 == 0 and B >= 2) else 1
    assert B % images_per_step == 0
    Bc = images_per_step
    assert Bc == 1 or S % 128 == 0, "batch-on-lanes fusion needs lane-aligned H*W"
    N = Bc * S

    # Pad channel counts to the 8-row sublane tile so every im2col concat operand
    # and matmul dim is tile-aligned (pad rows/columns carry zero weights).
    Cin_p = -(-Cin // 8) * 8
    Cout_p = -(-Cout // 8) * 8

    # NCHW consumed directly (contiguous reshape); channel zero-pad only.
    x = jnp.zeros((B, Cin_p, S), jnp.float32)
    x = x.at[:, :Cin, :].set(x_nchw.reshape(B, Cin, S).astype(jnp.float32))

    # (Cout, Cin, 3, 3) -> (Cout_p, 9*Cin_p), column index = (kh*3+kw)*Cin_p + cin.
    w1 = jnp.zeros((Cout_p, 9, Cin_p), jnp.float32)
    w1 = w1.at[:Cout, :, :Cin].set(
        jnp.transpose(params["w1"], (0, 2, 3, 1)).reshape(Cout, 9, Cin))
    w1 = w1.reshape(Cout_p, 9 * Cin_p)
    w2 = jnp.zeros((Cout_p, 9, Cout_p), jnp.float32)
    w2 = w2.at[:Cout, :, :Cout].set(
        jnp.transpose(params["w2"], (0, 2, 3, 1)).reshape(Cout, 9, Cout))
    w2 = w2.reshape(Cout_p, 9 * Cout_p)

    # Fold conv bias + eval-mode BN into per-channel scale/bias; pack with rope.
    def fold(gamma, beta, mean, var, conv_b):
        a = gamma / jnp.sqrt(var + eps)
        return a, beta + (conv_b - mean) * a

    s1, b1 = fold(params["g1"], params["be1"], params["m1"], params["v1"], params["cb1"])
    s2, b2 = fold(params["g2"], params["be2"], params["m2"], params["v2"], params["cb2"])
    rope = params["rope"].reshape(Cout)
    sb = jnp.zeros((Cout_p, 5), jnp.float32)
    sb = sb.at[:Cout].set(jnp.stack([s1, b1, s2, b2, rope], axis=1).astype(jnp.float32))

    # {0,1} boundary masks, pre-expanded to the im2col row layout so the kernel does
    # exactly one vmul per conv (no per-tap sublane slicing, no compare+select).
    m9 = np.tile(_boundary_masks(H, W), (1, Bc))            # (9, N)
    mask1 = jnp.asarray(np.repeat(m9, Cin_p, axis=0))       # (9*Cin_p,  N)
    mask2 = jnp.asarray(np.repeat(m9, Cout_p, axis=0))      # (9*Cout_p, N)

    # Static circular-shift amounts per 3x3 tap along the fused lane axis.
    offsets = [(kh - 1) * W + (kw - 1) for kh in range(3) for kw in range(3)]
    sign = -1 if _roll_matches_jnp() else 1
    shifts = tuple((sign * off) % N for off in offsets)

    kernel = functools.partial(_spectral_block_kernel, S=S, Bc=Bc, shifts=shifts)

    out = pl.pallas_call(
        kernel,
        out_shape=jax.ShapeDtypeStruct((B, Cout_p, S), jnp.float32),
        grid=(B // Bc,),
        in_specs=[
            pl.BlockSpec((Bc, Cin_p, S), lambda g: (g, 0, 0)),
            pl.BlockSpec((Cout_p, 9 * Cin_p), lambda g: (0, 0)),
            pl.BlockSpec((Cout_p, 9 * Cout_p), lambda g: (0, 0)),
            pl.BlockSpec((Cout_p, 5), lambda g: (0, 0)),
            pl.BlockSpec((9 * Cin_p, N), lambda g: (0, 0)),
            pl.BlockSpec((9 * Cout_p, N), lambda g: (0, 0)),
        ],
        out_specs=pl.BlockSpec((Bc, Cout_p, S), lambda g: (g, 0, 0)),
        compiler_params=pltpu.CompilerParams(dimension_semantics=("parallel",)),
    )(x, w1, w2, sb, mask1, mask2)

    return out[:, :Cout, :].reshape(B, Cout, H, W)


def reference(x_nchw, params, eps=1e-5):
    """Pure-JAX reference matching PyTorch eval-mode forward (NCHW)."""
    def conv(x, w, b):
        y = lax.conv_general_dilated(x, w, (1, 1), ((1, 1), (1, 1)),
                                     dimension_numbers=("NCHW", "OIHW", "NCHW"))
        return y + b[None, :, None, None]

    def bn(x, g, be, m, v):
        return (g[None, :, None, None] * (x - m[None, :, None, None])
                / jnp.sqrt(v[None, :, None, None] + eps) + be[None, :, None, None])

    h = jax.nn.relu(bn(conv(x_nchw, params["w1"], params["cb1"]),
                       params["g1"], params["be1"], params["m1"], params["v1"]))
    h = jax.nn.relu(bn(conv(h, params["w2"], params["cb2"]),
                       params["g2"], params["be2"], params["m2"], params["v2"]))
    return h * params["rope"][None, :, :, :]


def make_params(key, in_channels, out_channels):
    ks = jax.random.split(key, 12)
    return {
        "w1": 0.1 * jax.random.normal(ks[0], (out_channels, in_channels, 3, 3), jnp.float32),
        "cb1": 0.1 * jax.random.normal(ks[1], (out_channels,), jnp.float32),
        "g1": 1.0 + 0.1 * jax.random.normal(ks[2], (out_channels,), jnp.float32),
        "be1": 0.1 * jax.random.normal(ks[3], (out_channels,), jnp.float32),
        "m1": 0.1 * jax.random.normal(ks[4], (out_channels,), jnp.float32),
        "v1": 1.0 + 0.1 * jax.nn.softplus(jax.random.normal(ks[5], (out_channels,), jnp.float32)),
        "w2": 0.1 * jax.random.normal(ks[6], (out_channels, out_channels, 3, 3), jnp.float32),
        "cb2": 0.1 * jax.random.normal(ks[7], (out_channels,), jnp.float32),
        "g2": 1.0 + 0.1 * jax.random.normal(ks[8], (out_channels,), jnp.float32),
        "be2": 0.1 * jax.random.normal(ks[9], (out_channels,), jnp.float32),
        "m2": 0.1 * jax.random.normal(ks[10], (out_channels,), jnp.float32),
        "v2": 1.0 + 0.1 * jax.nn.softplus(jax.random.normal(ks[11], (out_channels,), jnp.float32)),
        "rope": jax.random.normal(jax.random.fold_in(key, 99), (out_channels, 1, 1), jnp.float32),
    }


if __name__ == "__main__":
    B, Cin, Cout, H, W = 2, 4, 8, 16, 16
    key = jax.random.PRNGKey(0)
    kx, kp = jax.random.split(key)
    x = jax.random.normal(kx, (B, Cin, H, W), jnp.float32)
    params = make_params(kp, Cin, Cout)

    ref = jax.block_until_ready(reference(x, params))

    # Default: 2 'parallel' grid steps (one image each) -> both v7x TCs get work.
    out = jax.block_until_ready(spectral_coordinate_block(x, params))
    assert out.shape == (B, Cout, H, W)
    assert jnp.allclose(out, ref, rtol=1e-4, atol=1e-4), float(jnp.max(jnp.abs(out - ref)))

    # Fully batch-fused single step (preferred on single-TC v5e/v6e).
    out_fused = jax.block_until_ready(
        spectral_coordinate_block(x, params, images_per_step=B))
    assert jnp.allclose(out_fused, ref, rtol=1e-4, atol=1e-4), \
        float(jnp.max(jnp.abs(out_fused - ref)))

    print("KERNEL_OK")
</pallas_src>

<mosaic_0001>
module attributes {stable_mosaic.version = 11 : i64} {
  func.func @k(%arg0: memref<8x256xf32, #tpu.memory_space<vmem>>, %arg1: memref<8x256xf32, #tpu.memory_space<vmem>>) attributes {dimension_semantics = [], scalar_prefetch = 0 : i64, scratch_operands = 0 : i64, tpu.core_type = #tpu.core_type<tc>} {
    %c0 = arith.constant 0 : index
    %c0_0 = arith.constant 0 : index
    %0 = vector.load %arg0[%c0, %c0_0] : memref<8x256xf32, #tpu.memory_space<vmem>>, vector<8x256xf32>
    %c1_i32 = arith.constant 1 : i32
    %1 = tpu.dynamic_rotate %0 by %c1_i32 dim 1 : vector<8x256xf32>, i32 -> vector<8x256xf32>
    %c0_1 = arith.constant 0 : index
    %c0_2 = arith.constant 0 : index
    %2 = vector.load %arg1[%c0_1, %c0_2] : memref<8x256xf32, #tpu.memory_space<vmem>>, vector<8x256xf32>
    tpu.vector_store %arg1[%c0_1, %c0_2], %1 {strides = array<i32>} : memref<8x256xf32, #tpu.memory_space<vmem>>, vector<8x256xf32>,
    return
  }
}

</mosaic_0001>

<llo_original>
// kernel: tpu_custom_call.1
$region0: #{tpu_custom_call.1}
  #allocation0 [shape = 'u32[]', space=smem, size = 0x4, offset = 0x4, fixed_abs, tag = 'smem constant byte address 0x4 - core index']
  #allocation1 [shape = 'u32[144,128]{1,0:T(1,128)}', space=vmem, size = 0x12000, scoped, tag = 'internal scratch']
  %s0 = inlined_call_operand.hbm [shape: f32[8,256], index: 0, kind: input, shape index: {}]
  %s1 = inlined_call_operand.hbm [shape: f32[8,256], index: 1, kind: output, shape index: {}]
  %s2 = sld [smem:[#allocation0]]
  $region18: #{tpu_custom_call.1} parent=0
    _
  %s4 = ssub.s32 1, %s2
  %s5 = scalar_select 0, %s4, %s2
  $region1: #{tpu_custom_call.1} parent=0
    #allocation2 [shape = 'u8[8192]{0}', space=vmem, size = 0x2000, scoped, tag = 'input window, operand 0, single buffered']
    #allocation3 [shape = 's32[1]{0}', space=sflag, size = 0x4, scoped, tag = 'scoped memory for tpu_custom_call.1']
    #allocation4 [shape = 's32[1]{0}', space=sflag, size = 0x4, scoped, tag = 'scoped memory for tpu_custom_call.1']
    #allocation5 [shape = 'u8[8192]{0}', space=vmem, size = 0x2000, scoped, tag = 'output window, operand 0, single buffered']
    %6 = vsyncpa [#allocation3], 0
    %7 = vsyncpa [#allocation4], 0
    // Predicated region
    $region2: #{tpu_custom_call.1} parent=1 // pred_check
      _
    $region3: #{tpu_custom_call.1} parent=1 // pred_check_branch
      %9 = sbr.rel (0) target = $region5
    $region4: #{tpu_custom_call.1} parent=1 // pred_region
      %s11 = ssub.s32 256, 256
      %12 = vsyncadd [#allocation3], %s11
      %s14 = sshll.u32 [#allocation2], 4
      %s15 = int_to_ptr.vmem [resolvable:$true] %s14
      %17 = dma.hbm_to_vmem [thread:$0]  %s0, 256, %s15, [#allocation3]
    $region5: #{tpu_custom_call.1} parent=1 // pred_fallthru
      _
    // Predicated region
    $region6: #{tpu_custom_call.1} parent=1 // pred_check
      _
    $region7: #{tpu_custom_call.1} parent=1 // pred_check_branch
      %19 = sbr.rel (0) target = $region9
    $region8: #{tpu_custom_call.1} parent=1 // pred_region
      %20 = dma.done [#allocation3], 256
    $region9: #{tpu_custom_call.1} parent=1 // pred_fallthru
      _
    %v21 = vld [vmem:[#allocation2] sm:$0xff]
    %v22 = vld [vmem:[#allocation2 + $0x8] sm:$0xff]
    %23 = vrot.lane.b32.xlu0 %v21, 1
    %v24 = vpop.permute.xlu0 %23
    %25 = vrot.lane.b32.xlu0 %v22, 1
    %v26 = vpop.permute.xlu0 %25
    %v27 = vlaneseq
    %v28 = vand.u32 %v27, 127
    %vm29 = vcmp.lt.s32.totalorder %v28, 1
    %v30 = vsel %vm29, %v24, %v26
    %v31 = vsel %vm29, %v26, %v24
    %32 = vst [vmem:[#allocation5] sm:$0xff] %v31
    %33 = vst [vmem:[#allocation5 + $0x8] sm:$0xff] %v30
    // Predicated region
    $region10: #{tpu_custom_call.1} parent=1 // pred_check
      _
    $region11: #{tpu_custom_call.1} parent=1 // pred_check_branch
      %35 = sbr.rel (0) target = $region13
    $region12: #{tpu_custom_call.1} parent=1 // pred_region
      %s37 = ssub.s32 256, 256
      %38 = vsyncadd [#allocation4], %s37
      %s40 = sshll.u32 [#allocation5], 4
      %s41 = int_to_ptr.vmem [resolvable:$true] %s40
      %43 = dma.vmem_to_hbm [thread:$0]  %s41, 256, %s1, [#allocation4]
    $region13: #{tpu_custom_call.1} parent=1 // pred_fallthru
      _
    // Predicated region
    $region14: #{tpu_custom_call.1} parent=1 // pred_check
      _
    $region15: #{tpu_custom_call.1} parent=1 // pred_check_branch
      %45 = sbr.rel (0) target = $region17
    $region16: #{tpu_custom_call.1} parent=1 // pred_region
      %46 = dma.done [#allocation4], 256
    $region17: #{tpu_custom_call.1} parent=1 // pred_fallthru
      _
    %47 = vsyncpa [#allocation3], 1
    %48 = vsyncpa [#allocation4], 1

</llo_original>
